<compile_context>
chip_gen: v6e
topology: v6e:2x2x1
jax: 0.10.0
libtpu: 0.0.40
codegen_flags: <defaults>
</compile_context>

<pallas_src>
import jax
import jax.numpy as jnp
from jax.experimental import pallas as pl
from jax.experimental.pallas import tpu as pltpu


def _linear_relu_fused_kernel(x_ref, w_ref, b_ref, o_ref):
    # 2-D grid (M, N); whole reduction (Din) resident in VMEM -> no accumulator.
    acc = jnp.dot(x_ref[...], w_ref[...], preferred_element_type=jnp.float32)
    acc = acc + b_ref[...].astype(jnp.float32)          # f32 epilogue
    o_ref[...] = jnp.maximum(acc, 0.0).astype(o_ref.dtype)


def _linear_relu_ktiled_kernel(x_ref, w_ref, b_ref, o_ref, acc_ref):
    # 3-D grid (M, N, K); f32 accumulator; bias + ReLU fused into last K step.
    k = pl.program_id(2)

    @pl.when(k == 0)
    def _():
        acc_ref[...] = jnp.zeros_like(acc_ref)

    acc_ref[...] += jnp.dot(x_ref[...], w_ref[...],
                            preferred_element_type=jnp.float32)

    @pl.when(k == pl.num_programs(2) - 1)
    def _():
        y = acc_ref[...] + b_ref[...].astype(jnp.float32)
        o_ref[...] = jnp.maximum(y, 0.0).astype(o_ref.dtype)


def _round_up(v, m):
    return (v + m - 1) // m * m


def linear_block(x, w, b, *, tm=256, tn=256, tk=512,
                 force_k_tiling=False,
                 vmem_limit_bytes=32 * 1024 * 1024):
    """x: (B, Din), w: (Din, Dout), b: (Dout,) -> relu(x @ w + b), (B, Dout)."""
    B, Din = x.shape
    Din_w, Dout = w.shape
    assert Din == Din_w and b.shape == (Dout,)
    out_dtype = x.dtype

    # Lane-dense tiles: tn multiple of 128 (unmasked vst), tm multiple of 8.
    tm_eff = min(tm, _round_up(B, 8))
    tn_eff = min(tn, _round_up(Dout, 128))

    # Tile K only if the whole-K tile set would blow the VMEM budget
    # (double-buffered x/W/out tiles, with headroom).
    ebytes = jnp.dtype(x.dtype).itemsize
    wholek_bytes = 2 * (tm_eff * Din + Din * tn_eff + tm_eff * tn_eff) * ebytes
    tile_k = force_k_tiling or (wholek_bytes > int(0.7 * vmem_limit_bytes))

    if tile_k:
        tk_eff = min(tk, _round_up(Din, 128))
        Kp = _round_up(Din, tk_eff)
    else:
        tk_eff = Din
        Kp = Din

    Mp = _round_up(B, tm_eff)
    Np = _round_up(Dout, tn_eff)

    # Zero-padding cannot change the matmul result; padded rows/cols are
    # sliced off at the end.
    xp = x if (Mp == B and Kp == Din) else jnp.pad(x, ((0, Mp - B), (0, Kp - Din)))
    wp = w if (Kp == Din and Np == Dout) else jnp.pad(w, ((0, Kp - Din), (0, Np - Dout)))
    bp = (b if Np == Dout else jnp.pad(b, (0, Np - Dout))).reshape(1, Np)

    grid_m, grid_n = Mp // tm_eff, Np // tn_eff

    if not tile_k:
        out = pl.pallas_call(
            _linear_relu_fused_kernel,
            out_shape=jax.ShapeDtypeStruct((Mp, Np), out_dtype),
            grid_spec=pltpu.PrefetchScalarGridSpec(
                num_scalar_prefetch=0,
                grid=(grid_m, grid_n),
                in_specs=[
                    pl.BlockSpec((tm_eff, Kp), lambda i, j: (i, 0)),
                    pl.BlockSpec((Kp, tn_eff), lambda i, j: (0, j)),
                    pl.BlockSpec((1, tn_eff), lambda i, j: (0, j)),
                ],
                out_specs=pl.BlockSpec((tm_eff, tn_eff), lambda i, j: (i, j)),
            ),
            compiler_params=pltpu.CompilerParams(
                dimension_semantics=("parallel", "parallel"),
                vmem_limit_bytes=vmem_limit_bytes,
            ),
        )(xp, wp, bp)
    else:
        grid_k = Kp // tk_eff
        out = pl.pallas_call(
            _linear_relu_ktiled_kernel,
            out_shape=jax.ShapeDtypeStruct((Mp, Np), out_dtype),
            grid_spec=pltpu.PrefetchScalarGridSpec(
                num_scalar_prefetch=0,
                grid=(grid_m, grid_n, grid_k),
                in_specs=[
                    pl.BlockSpec((tm_eff, tk_eff), lambda i, j, k: (i, k)),
                    pl.BlockSpec((tk_eff, tn_eff), lambda i, j, k: (k, j)),
                    pl.BlockSpec((1, tn_eff), lambda i, j, k: (0, j)),
                ],
                out_specs=pl.BlockSpec((tm_eff, tn_eff), lambda i, j, k: (i, j)),
                scratch_shapes=[pltpu.VMEM((tm_eff, tn_eff), jnp.float32)],
            ),
            compiler_params=pltpu.CompilerParams(
                dimension_semantics=("parallel", "parallel", "arbitrary"),
                vmem_limit_bytes=vmem_limit_bytes,
            ),
        )(xp, wp, bp)

    if Mp != B or Np != Dout:
        out = out[:B, :Dout]
    return out


def linear_block_ref(x, w, b):
    return jnp.maximum(x @ w + b[None, :], 0.0)


def _make_case(key, batch, din, dout):
    kx, kw, kb = jax.random.split(key, 3)
    bound = 1.0 / (din ** 0.5)  # mimic PyTorch nn.Linear init
    w = jax.random.uniform(kw, (din, dout), jnp.float32, -bound, bound)
    b = jax.random.uniform(kb, (dout,), jnp.float32, -bound, bound)
    x = jax.random.normal(kx, (batch, din), jnp.float32)
    return x, w, b


if __name__ == "__main__":
    key = jax.random.PRNGKey(0)
    k1, k2, k3 = jax.random.split(key, 3)

    # 1) tile-aligned, lane-dense shape (fused single-K path)
    x, w, b = _make_case(k1, batch=64, din=128, dout=128)
    out = jax.block_until_ready(linear_block(x, w, b))
    assert out.shape == (64, 128)
    assert jnp.allclose(out, linear_block_ref(x, w, b), atol=1e-5, rtol=1e-5)

    # 2) toy module-scale shape (exercises zero-pad + slice-back path)
    x, w, b = _make_case(k2, batch=8, din=32, dout=32)
    out = jax.block_until_ready(linear_block(x, w, b))
    assert out.shape == (8, 32)
    assert jnp.allclose(out, linear_block_ref(x, w, b), atol=1e-5, rtol=1e-5)

    # 3) K-tiled accumulator path (forced) with fused bias+ReLU finalize
    x, w, b = _make_case(k3, batch=128, din=768, dout=256)
    out = jax.block_until_ready(
        linear_block(x, w, b, tk=256, force_k_tiling=True))
    assert out.shape == (128, 256)
    assert jnp.allclose(out, linear_block_ref(x, w, b), atol=1e-4, rtol=1e-4)

    print("KERNEL_OK")
</pallas_src>

<mosaic_0001>
module attributes {stable_mosaic.version = 11 : i64} {
  func.func @_linear_relu_fused_kernel(%arg0: i32, %arg1: i32, %arg2: memref<64x128xf32, #tpu.memory_space<vmem>>, %arg3: memref<128x128xf32, #tpu.memory_space<vmem>>, %arg4: memref<1x128xf32, #tpu.memory_space<vmem>>, %arg5: memref<64x128xf32, #tpu.memory_space<vmem>>) attributes {dimension_semantics = [#tpu.dimension_semantics<parallel>, #tpu.dimension_semantics<parallel>], iteration_bounds = array<i64: 1, 1>, scalar_prefetch = 0 : i64, scratch_operands = 0 : i64, tpu.core_type = #tpu.core_type<tc>, window_params = [{transform_indices = @transform_0, window_bounds = array<i64: 64, 128>}, {transform_indices = @transform_1, window_bounds = array<i64: 128, 128>}, {transform_indices = @transform_2, window_bounds = array<i64: 1, 128>}, {transform_indices = @transform_3, window_bounds = array<i64: 64, 128>}]} {
    %c0 = arith.constant 0 : index
    %c0_0 = arith.constant 0 : index
    %0 = vector.load %arg2[%c0, %c0_0] : memref<64x128xf32, #tpu.memory_space<vmem>>, vector<64x128xf32>
    %c0_1 = arith.constant 0 : index
    %c0_2 = arith.constant 0 : index
    %1 = vector.load %arg3[%c0_1, %c0_2] : memref<128x128xf32, #tpu.memory_space<vmem>>, vector<128x128xf32>
    %cst = arith.constant dense<0.000000e+00> : vector<64x128xf32>
    %2 = tpu.matmul %0, %1, %cst {dimension_numbers = #tpu.dot_dimension_numbers<[1], [0], [0], [1], [0, 0, 1, 1], [], []>} : vector<64x128xf32>, vector<128x128xf32>, vector<64x128xf32> -> vector<64x128xf32>
    %c0_3 = arith.constant 0 : index
    %c0_4 = arith.constant 0 : index
    %3 = vector.load %arg4[%c0_3, %c0_4] : memref<1x128xf32, #tpu.memory_space<vmem>>, vector<1x128xf32>
    %4 = vector.broadcast %3 : vector<1x128xf32> to vector<64x128xf32>
    %5 = arith.addf %2, %4 : vector<64x128xf32>
    %cst_5 = arith.constant 0.000000e+00 : f32
    %6 = vector.broadcast %cst_5 : f32 to vector<64x128xf32>
    %7 = arith.maximumf %5, %6 : vector<64x128xf32>
    %c0_6 = arith.constant 0 : index
    %c0_7 = arith.constant 0 : index
    %8 = vector.load %arg5[%c0_6, %c0_7] : memref<64x128xf32, #tpu.memory_space<vmem>>, vector<64x128xf32>
    tpu.vector_store %arg5[%c0_6, %c0_7], %7 {strides = array<i32>} : memref<64x128xf32, #tpu.memory_space<vmem>>, vector<64x128xf32>,
    return
  }
  func.func @transform_0(%arg0: i32, %arg1: i32) -> (i32, i32) {
    %c0_i32 = arith.constant 0 : i32
    %c0_i32_0 = arith.constant 0 : i32
    return %arg0, %c0_i32 : i32, i32
  }
  func.func @transform_1(%arg0: i32, %arg1: i32) -> (i32, i32) {
    %c0_i32 = arith.constant 0 : i32
    %c0_i32_0 = arith.constant 0 : i32
    return %c0_i32, %arg1 : i32, i32
  }
  func.func @transform_2(%arg0: i32, %arg1: i32) -> (i32, i32) {
    %c0_i32 = arith.constant 0 : i32
    %c0_i32_0 = arith.constant 0 : i32
    return %c0_i32, %arg1 : i32, i32
  }
  func.func @transform_3(%arg0: i32, %arg1: i32) -> (i32, i32) {
    %c0_i32 = arith.constant 0 : i32
    return %arg0, %arg1 : i32, i32
  }
}

</mosaic_0001>

<llo_original>
// kernel: tpu_custom_call.1
$region0: #{tpu_custom_call.1}
  #allocation0 [shape = 'u32[]', space=smem, size = 0x4, offset = 0x4, fixed_abs, tag = 'smem constant byte address 0x4 - core index']
  #allocation1 [shape = 'u32[144,128]{1,0:T(1,128)}', space=vmem, size = 0x12000, scoped, tag = 'internal scratch']
  %s0 = inlined_call_operand.hbm [shape: f32[64,128], index: 0, kind: input, shape index: {}]
  %s1 = inlined_call_operand.hbm [shape: f32[128,128], index: 1, kind: input, shape index: {}]
  %s2 = inlined_call_operand.vmem [shape: f32[1,128], index: 2, kind: input, shape index: {}]
  %s3 = inlined_call_operand.hbm [shape: f32[64,128], index: 3, kind: output, shape index: {}]
  %s4 = sld [smem:[#allocation0]]
  $region30: #{tpu_custom_call.1} parent=0
    _
  %s6 = ssub.s32 1, %s4
  %s7 = scalar_select 0, %s6, %s4
  $region1: #{tpu_custom_call.1} parent=0
    #allocation2 [shape = 'u8[32768]{0}', space=vmem, size = 0x8000, scoped, tag = 'input window, operand 0, single buffered']
    #allocation3 [shape = 's32[1]{0}', space=sflag, size = 0x4, scoped, tag = 'scoped memory for tpu_custom_call.1']
    #allocation4 [shape = 's32[1]{0}', space=sflag, size = 0x4, scoped, tag = 'scoped memory for tpu_custom_call.1']
    #allocation5 [shape = 'u8[65536]{0}', space=vmem, size = 0x10000, scoped, tag = 'input window, operand 1, single buffered']
    #allocation6 [shape = 's32[1]{0}', space=sflag, size = 0x4, scoped, tag = 'scoped memory for tpu_custom_call.1']
    #allocation7 [shape = 'u8[32768]{0}', space=vmem, size = 0x8000, scoped, tag = 'output window, operand 0, single buffered']
    %8 = vsyncpa [#allocation3], 0
    %9 = vsyncpa [#allocation6], 0
    %10 = vsyncpa [#allocation4], 0
    // Predicated region
    $region2: #{tpu_custom_call.1} parent=1 // pred_check
      _
    $region3: #{tpu_custom_call.1} parent=1 // pred_check_branch
      %12 = sbr.rel (0) target = $region5
    $region4: #{tpu_custom_call.1} parent=1 // pred_region
      %s14 = ssub.s32 1024, 1024
      %15 = vsyncadd [#allocation3], %s14
      %s16 = sshll.u32 [#allocation2], 4
      %s17 = int_to_ptr.vmem [resolvable:$true] %s16
      %22 = dma.hbm_to_vmem [thread:$0]  %s0, 1024, %s17, [#allocation3], 128, 128, 8
    $region5: #{tpu_custom_call.1} parent=1 // pred_fallthru
      _
    // Predicated region
    $region6: #{tpu_custom_call.1} parent=1 // pred_check
      _
    $region7: #{tpu_custom_call.1} parent=1 // pred_check_branch
      %24 = sbr.rel (0) target = $region9
    $region8: #{tpu_custom_call.1} parent=1 // pred_region
      %s26 = ssub.s32 2048, 2048
      %27 = vsyncadd [#allocation6], %s26
      %s28 = sshll.u32 [#allocation5], 4
      %s29 = int_to_ptr.vmem [resolvable:$true] %s28
      %34 = dma.hbm_to_vmem [thread:$0]  %s1, 2048, %s29, [#allocation6], 128, 128, 8
    $region9: #{tpu_custom_call.1} parent=1 // pred_fallthru
      _
    // Predicated region
    $region10: #{tpu_custom_call.1} parent=1 // pred_check
      _
    $region11: #{tpu_custom_call.1} parent=1 // pred_check_branch
      %36 = sbr.rel (0) target = $region13
    $region12: #{tpu_custom_call.1} parent=1 // pred_region
      _
    $region13: #{tpu_custom_call.1} parent=1 // pred_fallthru
      _
    // Predicated region
    $region14: #{tpu_custom_call.1} parent=1 // pred_check
      _
    $region15: #{tpu_custom_call.1} parent=1 // pred_check_branch
      %38 = sbr.rel (0) target = $region17
    $region16: #{tpu_custom_call.1} parent=1 // pred_region
      %39 = dma.done [#allocation3], 1024
    $region17: #{tpu_custom_call.1} parent=1 // pred_fallthru
      _
    // Predicated region
    $region18: #{tpu_custom_call.1} parent=1 // pred_check
      _
    $region19: #{tpu_custom_call.1} parent=1 // pred_check_branch
      %41 = sbr.rel (0) target = $region21
    $region20: #{tpu_custom_call.1} parent=1 // pred_region
      %42 = dma.done [#allocation6], 2048
    $region21: #{tpu_custom_call.1} parent=1 // pred_fallthru
      _
    %v43 = vld [vmem:[#allocation2] sm:$0xff]
    %v44 = vld [vmem:[#allocation2 + $0x8] sm:$0xff]
    %v45 = vld [vmem:[#allocation2 + $0x10] sm:$0xff]
    %v46 = vld [vmem:[#allocation2 + $0x18] sm:$0xff]
    %v47 = vld [vmem:[#allocation2 + $0x20] sm:$0xff]
    %v48 = vld [vmem:[#allocation2 + $0x28] sm:$0xff]
    %v49 = vld [vmem:[#allocation2 + $0x30] sm:$0xff]
    %v50 = vld [vmem:[#allocation2 + $0x38] sm:$0xff]
    %v51 = vld [vmem:[#allocation5] sm:$0xff]
    %v52 = vld [vmem:[#allocation5 + $0x8] sm:$0xff]
    %v53 = vld [vmem:[#allocation5 + $0x10] sm:$0xff]
    %v54 = vld [vmem:[#allocation5 + $0x18] sm:$0xff]
    %v55 = vld [vmem:[#allocation5 + $0x20] sm:$0xff]
    %v56 = vld [vmem:[#allocation5 + $0x28] sm:$0xff]
    %v57 = vld [vmem:[#allocation5 + $0x30] sm:$0xff]
    %v58 = vld [vmem:[#allocation5 + $0x38] sm:$0xff]
    %v59 = vld [vmem:[#allocation5 + $0x40] sm:$0xff]
    %v60 = vld [vmem:[#allocation5 + $0x48] sm:$0xff]
    %v61 = vld [vmem:[#allocation5 + $0x50] sm:$0xff]
    %v62 = vld [vmem:[#allocation5 + $0x58] sm:$0xff]
    %v63 = vld [vmem:[#allocation5 + $0x60] sm:$0xff]
    %v64 = vld [vmem:[#allocation5 + $0x68] sm:$0xff]
    %v65 = vld [vmem:[#allocation5 + $0x70] sm:$0xff]
    %v66 = vld [vmem:[#allocation5 + $0x78] sm:$0xff]
    %v67 = vld [vmem:[%s2] sm:$0x1]
    %v69 = vlaneseq
    %v70 = vshrl.u32 %v69, 7
    %v71 = vsub.s32 0, %v70
    %v72 = vrot.slane %v67, %v71
    %74 = vmatprep.subr.mxu0 0.0
    %75 = vmatpush1.msra.mxu0 %v66
    %76 = vmatprep.subr.mxu0 0.0
    %77 = vmatpush1.msra.mxu0 %v65
    %78 = vmatprep.subr.mxu0 0.0
    %79 = vmatpush1.msra.mxu0 %v64
    %80 = vmatprep.subr.mxu0 0.0
    %81 = vmatpush1.msra.mxu0 %v63
    %82 = vmatprep.subr.mxu0 0.0
    %83 = vmatpush1.msra.mxu0 %v62
    %84 = vmatprep.subr.mxu0 0.0
    %85 = vmatpush1.msra.mxu0 %v61
    %86 = vmatprep.subr.mxu0 0.0
    %87 = vmatpush1.msra.mxu0 %v60
    %88 = vmatprep.subr.mxu0 0.0
    %89 = vmatpush1.msra.mxu0 %v59
    %90 = vmatprep.subr.mxu0 0.0
    %91 = vmatpush1.msra.mxu0 %v58
    %92 = vmatprep.subr.mxu0 0.0
    %93 = vmatpush1.msra.mxu0 %v57
    %94 = vmatprep.subr.mxu0 0.0
    %95 = vmatpush1.msra.mxu0 %v56
    %96 = vmatprep.subr.mxu0 0.0
    %97 = vmatpush1.msra.mxu0 %v55
    %98 = vmatprep.subr.mxu0 0.0
    %99 = vmatpush1.msra.mxu0 %v54
    %100 = vmatprep.subr.mxu0 0.0
    %101 = vmatpush1.msra.mxu0 %v53
    %102 = vmatprep.subr.mxu0 0.0
    %103 = vmatpush1.msra.mxu0 %v52
    %104 = vmatprep.subr.mxu0 0.0
    %105 = vmatpush1.msra.mxu0 %v51
    %106 = vmatprep.subr.mxu0 0.0
    %107 = vmatpush2.msra.mxu0 0.0
    %108 = vmatprep.subr.mxu0 0.0
    %109 = vmatpush2.msra.mxu0 0.0
    %110 = vmatprep.subr.mxu0 0.0
    %111 = vmatpush2.msra.mxu0 0.0
    %112 = vmatprep.subr.mxu0 0.0
    %113 = vmatpush2.msra.mxu0 0.0
    %114 = vmatprep.subr.mxu0 0.0
    %115 = vmatpush2.msra.mxu0 0.0
    %116 = vmatprep.subr.mxu0 0.0
    %117 = vmatpush2.msra.mxu0 0.0
    %118 = vmatprep.subr.mxu0 0.0
    %119 = vmatpush2.msra.mxu0 0.0
    %120 = vmatprep.subr.mxu0 0.0
    %121 = vmatpush2.msra.mxu0 0.0
    %122 = vmatprep.subr.mxu0 0.0
    %123 = vmatpush2.msra.mxu0 0.0
    %124 = vmatprep.subr.mxu0 0.0
    %125 = vmatpush2.msra.mxu0 0.0
    %126 = vmatprep.subr.mxu0 0.0
    %127 = vmatpush2.msra.mxu0 0.0
    %128 = vmatprep.subr.mxu0 0.0
    %129 = vmatpush2.msra.mxu0 0.0
    %130 = vmatprep.subr.mxu0 0.0
    %131 = vmatpush2.msra.mxu0 0.0
    %132 = vmatprep.subr.mxu0 0.0
    %133 = vmatpush2.msra.mxu0 0.0
    %134 = vmatprep.subr.mxu0 0.0
    %135 = vmatpush2.msra.mxu0 0.0
    %136 = vmatprep.subr.mxu0 0.0
    %137 = vmatpush2.msra.mxu0 0.0
    %138 = vmatprep.mubr.f32.mxu0 0.0
    %139 = vmatmul.mubr.f32.gmra.mxu0 %v43
    %v140 = vpop.f32.mrf.mxu0
    %v141 = vadd.f32 %v72, %v140
    %v142 = vpop.f32.mrf.mxu0
    %143 = vmatprep.mubr.f32.mxu0 0.0
    %144 = vmatmul.mubr.f32.gmra.mxu0 %v44
    %v145 = vpop.f32.mrf.mxu0
    %v146 = vadd.f32 %v72, %v145
    %v147 = vpop.f32.mrf.mxu0
    %148 = vmatprep.mubr.f32.mxu0 0.0
    %149 = vmatmul.mubr.f32.gmra.mxu0 %v45
    %v150 = vpop.f32.mrf.mxu0
    %v151 = vadd.f32 %v72, %v150
    %v152 = vpop.f32.mrf.mxu0
    %153 = vmatprep.mubr.f32.mxu0 0.0
    %154 = vmatmul.mubr.f32.gmra.mxu0 %v46
    %v155 = vpop.f32.mrf.mxu0
    %v156 = vadd.f32 %v72, %v155
    %v157 = vpop.f32.mrf.mxu0
    %158 = vmatprep.mubr.f32.mxu0 0.0
    %159 = vmatmul.mubr.f32.gmra.mxu0 %v47
    %v160 = vpop.f32.mrf.mxu0
    %v161 = vadd.f32 %v72, %v160
    %v162 = vpop.f32.mrf.mxu0
    %163 = vmatprep.mubr.f32.mxu0 0.0
    %164 = vmatmul.mubr.f32.gmra.mxu0 %v48
    %v165 = vpop.f32.mrf.mxu0
    %v166 = vadd.f32 %v72, %v165
    %v167 = vpop.f32.mrf.mxu0
    %168 = vmatprep.mubr.f32.mxu0 0.0
    %169 = vmatmul.mubr.f32.gmra.mxu0 %v49
    %v170 = vpop.f32.mrf.mxu0
    %v171 = vadd.f32 %v72, %v170
    %v172 = vpop.f32.mrf.mxu0
    %173 = vmatprep.mubr.f32.mxu0 0.0
    %174 = vmatmul.mubr.f32.gmra.mxu0 %v50
    %v175 = vpop.f32.mrf.mxu0
    %v176 = vadd.f32 %v72, %v175
    %v177 = vpop.f32.mrf.mxu0
    %178 = vdwg.mxu0
    %v179 = vmax.f32 %v141, 0.0
    %v180 = vmax.f32 %v146, 0.0
    %v181 = vmax.f32 %v151, 0.0
    %v182 = vmax.f32 %v156, 0.0
    %v183 = vmax.f32 %v161, 0.0
    %v184 = vmax.f32 %v166, 0.0
    %v185 = vmax.f32 %v171, 0.0
    %v186 = vmax.f32 %v176, 0.0
    %187 = vst [vmem:[#allocation7] sm:$0xff] %v179
    %188 = vst [vmem:[#allocation7 + $0x8] sm:$0xff] %v180
    %189 = vst [vmem:[#allocation7 + $0x10] sm:$0xff] %v181
    %190 = vst [vmem:[#allocation7 + $0x18] sm:$0xff] %v182
    %191 = vst [vmem:[#allocation7 + $0x20] sm:$0xff] %v183
    %192 = vst [vmem:[#allocation7 + $0x28] sm:$0xff] %v184
    %193 = vst [vmem:[#allocation7 + $0x30] sm:$0xff] %v185
    %194 = vst [vmem:[#allocation7 + $0x38] sm:$0xff] %v186
    // Predicated region
    $region22: #{tpu_custom_call.1} parent=1 // pred_check
      _
    $region23: #{tpu_custom_call.1} parent=1 // pred_check_branch
      %196 = sbr.rel (0) target = $region25
    $region24: #{tpu_custom_call.1} parent=1 // pred_region
      %s198 = ssub.s32 1024, 1024
      %199 = vsyncadd [#allocation4], %s198
      %s200 = sshll.u32 [#allocation7], 4
      %s201 = int_to_ptr.vmem [resolvable:$true] %s200
      %206 = dma.vmem_to_hbm [thread:$0]  %s201, 1024, %s3, [#allocation4], 128, 128, 8
    $region25: #{tpu_custom_call.1} parent=1 // pred_fallthru
      _
    // Predicated region
    $region26: #{tpu_custom_call.1} parent=1 // pred_check
      _
    $region27: #{tpu_custom_call.1} parent=1 // pred_check_branch
      %208 = sbr.rel (0) target = $region29
    $region28: #{tpu_custom_call.1} parent=1 // pred_region
      %209 = dma.done [#allocation4], 1024
    $region29: #{tpu_custom_call.1} parent=1 // pred_fallthru
      _
    %210 = vsyncpa [#allocation3], 1
    %211 = vsyncpa [#allocation6], 1
    %212 = vsyncpa [#allocation4], 1

</llo_original>
